<compile_context>
chip_gen: v7x
topology: tpu7x:2x2x1
jax: 0.10.0
libtpu: 0.0.40
codegen_flags: <defaults>
</compile_context>

<pallas_src>
import jax
import jax.numpy as jnp
from jax.experimental import pallas as pl
from jax.experimental.pallas import tpu as pltpu


def conv1d_k3s2_kernel(xp_ref, w12_ref, w0_ref, b_ref, halo_ref, o_ref):
    """One (batch, length-tile) block of Conv1d(C, C, 3, stride=2, padding=1).

    xp_ref:   (2C, TL) parity-split operand:
                rows [0:C)  = x[:, 2t]       (tap k=1, conv centre)
                rows [C:2C) = x[:, 2t + 1]   (tap k=2, right; zero past the end of x)
    w12_ref:  (C, 2C)  [ w[:, :, 1] | w[:, :, 2] ]  lane-dense, resident
    w0_ref:   (C, C)   w[:, :, 0], resident
    b_ref:    (C, 1)   bias, resident
    halo_ref: (C, 1)   x[:, 2*j*TL - 1] (left-neighbour odd column; zeros for tile 0)
    o_ref:    (C, TL)  output tile
    """
    C = w0_ref.shape[0]
    TL = o_ref.shape[-1]

    xp = xp_ref[...]                     # (2C, TL)
    odd = xp[C:, :]                      # tap k=2 slab, (C, TL)

    # Tap k=0 = odd slab shifted right by one output column; column 0 of this tile
    # comes from the halo (previous tile's last odd column / the conv's left padding).
    if TL > 1:
        left = jnp.concatenate([halo_ref[...], odd[:, : TL - 1]], axis=1)
    else:
        left = halo_ref[...]

    # Single K=2C contraction for the two slabs already resident in xp, plus K=C for
    # the shifted tap.  f32 accumulation throughout.
    acc = jnp.dot(w12_ref[...], xp, preferred_element_type=jnp.float32)
    acc = acc + jnp.dot(w0_ref[...], left, preferred_element_type=jnp.float32)
    o_ref[...] = (acc + b_ref[...]).astype(o_ref.dtype)


def _choose_tl(B, C, L_out, elem_bytes=4):
    """Lane tile along the output-length axis.

    Budget the double-buffered (input + output) tiles plus the resident parameters
    against a conservative 40 MiB so the working set fits v7x's 64 MiB physical VMEM
    (v5e/v6e have 128 MiB).  Multi-tile TL is a multiple of 128 (unmasked lane-dense
    stores); small problems get one full-length tile (block == full dim).
    """
    per_col = 2 * (2 * C + C) * elem_bytes             # double-buffered in (2C) + out (C)
    resident = 2 * (3 * C * C + C) * elem_bytes        # weights + bias, worst-case 2 bufs
    budget = max((40 << 20) - resident, 4 << 20)
    max_tl = max(budget // per_col, 128)
    if L_out <= 128 or (L_out <= max_tl and (B >= 2 or L_out < 256)):
        return L_out                                   # one full-length lane-dense tile
    tl = min(max_tl, 2048)
    if B == 1:                                         # keep >=2 tiles for the 2 v7x TCs
        tl = min(tl, max(-(-L_out // 2), 128))
    return max(128, (tl // 128) * 128)


def downsample1d(x, w, b, *, tl=None, single_buffer_params=True):
    """Conv1d(C, C, kernel_size=3, stride=2, padding=1).

    x: (B, C, L) f32;  w: (C, C, 3);  b: (C,).  Returns (B, C, (L + 1) // 2).
    """
    B, C, L = x.shape
    L_out = (L + 1) // 2
    elem = jnp.dtype(x.dtype).itemsize

    # ---- wrapper-side layout prep (strided slices + pad + concat fuse into a single
    #      pass over x in XLA; no 3C im2col intermediate is materialized) ----
    # x_pad[2t+1] = x[2t]  -> even slab (tap k=1);  x_pad[2t+2] = x[2t+1] -> odd slab.
    x_even = x[:, :, 0::2]                                       # (B, C, L_out)
    x_odd = x[:, :, 1::2]                                        # (B, C, L//2)
    if x_odd.shape[-1] < L_out:                                  # right conv pad (L odd)
        x_odd = jnp.pad(x_odd, ((0, 0), (0, 0), (0, L_out - x_odd.shape[-1])))
    xp = jnp.concatenate([x_even, x_odd], axis=1)                # (B, 2C, L_out)

    # Lane-dense weights: the k=0 tap reuses the odd slab, so no 3->128 padded dims.
    w12 = jnp.concatenate([w[:, :, 1], w[:, :, 2]], axis=1)      # (C, 2C)
    w0 = w[:, :, 0]                                              # (C, C)
    b2 = b.reshape(C, 1)

    # ---- tiling ----
    TL = _choose_tl(B, C, L_out, elem) if tl is None else int(tl)
    TL = max(1, min(TL, L_out))
    n_t = pl.cdiv(L_out, TL)

    # 1-column halo per length tile: x_odd[:, j*TL - 1] (== x[:, 2*j*TL - 1]); zeros
    # for tile 0 (the conv's left padding).  Shape (B, n_t, C, 1) so the block equals
    # the full trailing dims.
    if n_t > 1:
        halo_cols = x_odd[:, :, TL - 1 :: TL][:, :, : n_t - 1]           # (B, C, n_t-1)
        halo = jnp.concatenate(
            [jnp.zeros((B, C, 1), x.dtype), halo_cols], axis=2)          # (B, C, n_t)
    else:
        halo = jnp.zeros((B, C, 1), x.dtype)
    halo = jnp.transpose(halo, (0, 2, 1))[..., None]                     # (B, n_t, C, 1)

    def _resident_spec(shape):
        kwargs = {}
        if single_buffer_params:
            # Constant block index across the whole grid -> one buffer is enough.
            kwargs["pipeline_mode"] = pl.Buffered(1)
        return pl.BlockSpec(shape, lambda bi, j: (0,) * len(shape), **kwargs)

    in_specs = [
        pl.BlockSpec((None, 2 * C, TL), lambda bi, j: (bi, 0, j)),       # parity operand
        _resident_spec((C, 2 * C)),                                      # w12 (resident)
        _resident_spec((C, C)),                                          # w0  (resident)
        _resident_spec((C, 1)),                                          # bias (resident)
        pl.BlockSpec((None, None, C, 1), lambda bi, j: (bi, j, 0, 0)),   # halo column
    ]
    out_specs = pl.BlockSpec((None, C, TL), lambda bi, j: (bi, 0, j))

    # Scoped-VMEM limit sized to the working set (v5e default is only 16 MiB), capped
    # below v7x's 64 MiB physical VMEM.
    work = (2 * (2 * C + C) * TL + 2 * (3 * C * C + C) + 2 * C) * elem
    vmem_limit = int(min(max(2 * work, 32 << 20), 56 << 20))

    cost = pl.CostEstimate(
        flops=2 * B * C * (3 * C) * L_out,
        transcendentals=0,
        bytes_accessed=(B * 3 * C * L_out + (3 * C * C + C) + B * n_t * C) * elem,
    )

    return pl.pallas_call(
        conv1d_k3s2_kernel,
        out_shape=jax.ShapeDtypeStruct((B, C, L_out), x.dtype),
        grid=(B, n_t),
        in_specs=in_specs,
        out_specs=out_specs,
        compiler_params=pltpu.CompilerParams(
            dimension_semantics=("parallel", "parallel"),
            vmem_limit_bytes=vmem_limit,
        ),
        cost_estimate=cost,
    )(xp, w12, w0, b2, halo)


downsample1d_jit = jax.jit(downsample1d, static_argnames=("tl", "single_buffer_params"))


def _run(x, w, b, **kw):
    try:
        return jax.block_until_ready(downsample1d_jit(x, w, b, **kw))
    except Exception:
        # Fallback if this jax version rejects pipeline_mode=pl.Buffered(1): same
        # kernel with default (double) buffering of the resident parameters.
        return jax.block_until_ready(
            downsample1d_jit(x, w, b, single_buffer_params=False, **kw))


def _reference(x, w, b):
    out = jax.lax.conv_general_dilated(
        x, w, window_strides=(2,), padding=((1, 1),),
        dimension_numbers=("NCH", "OIH", "NCH"),
        precision=jax.lax.Precision.HIGHEST)
    return out + b[None, :, None]


def _init_params(key, C):
    kw, kb = jax.random.split(key)
    bound = 1.0 / ((C * 3) ** 0.5)   # PyTorch Conv1d default init range (fan_in = 3C)
    w = jax.random.uniform(kw, (C, C, 3), jnp.float32, -bound, bound)
    b = jax.random.uniform(kb, (C,), jnp.float32, -bound, bound)
    return w, b


if __name__ == "__main__":
    key = jax.random.PRNGKey(0)
    k1, k2, k3, k4 = jax.random.split(key, 4)

    # Primary demo shape consistent with Downsample1D: (batch=2, dim=4, length=16).
    B, C, L = 2, 4, 16
    w, b = _init_params(k1, C)
    x = jax.random.normal(k2, (B, C, L), jnp.float32)

    out = _run(x, w, b)
    assert out.shape == (B, C, (L + 1) // 2), out.shape
    assert jnp.allclose(out, _reference(x, w, b), atol=2e-2, rtol=2e-2)

    # Secondary check: batch 1, odd length, forced multi-tile path (exercises the halo
    # column, the partial last tile and the B==1 length split).
    B2, C2, L2 = 1, 8, 301
    w2, b2 = _init_params(k3, C2)
    x2 = jax.random.normal(k4, (B2, C2, L2), jnp.float32)

    out2 = _run(x2, w2, b2, tl=128)
    assert out2.shape == (B2, C2, (L2 + 1) // 2), out2.shape
    assert jnp.allclose(out2, _reference(x2, w2, b2), atol=2e-2, rtol=2e-2)

    print("KERNEL_OK")
</pallas_src>

<mosaic_0001>
module attributes {stable_mosaic.version = 11 : i64} {
  func.func @conv1d_k3s2_kernel(%arg0: i32, %arg1: i32, %arg2: memref<1x8x8xf32, #tpu.memory_space<vmem>>, %arg3: memref<4x8xf32, #tpu.memory_space<vmem>>, %arg4: memref<4x4xf32, #tpu.memory_space<vmem>>, %arg5: memref<4x1xf32, #tpu.memory_space<vmem>>, %arg6: memref<1x1x4x1xf32, #tpu.memory_space<vmem>>, %arg7: memref<1x4x8xf32, #tpu.memory_space<vmem>>) attributes {dimension_semantics = [#tpu.dimension_semantics<parallel>, #tpu.dimension_semantics<parallel>], iteration_bounds = array<i64: 2, 1>, scalar_prefetch = 0 : i64, scratch_operands = 0 : i64, tpu.core_type = #tpu.core_type<tc>, window_params = [{transform_indices = @transform_0, window_bounds = array<i64: 1, 8, 8>}, {pipeline_mode = #tpu.pipeline_mode<synchronous>, transform_indices = @transform_1, window_bounds = array<i64: 4, 8>}, {pipeline_mode = #tpu.pipeline_mode<synchronous>, transform_indices = @transform_2, window_bounds = array<i64: 4, 4>}, {pipeline_mode = #tpu.pipeline_mode<synchronous>, transform_indices = @transform_3, window_bounds = array<i64: 4, 1>}, {transform_indices = @transform_4, window_bounds = array<i64: 1, 1, 4, 1>}, {transform_indices = @transform_5, window_bounds = array<i64: 1, 4, 8>}]} {
    %c0 = arith.constant 0 : index
    %c0_0 = arith.constant 0 : index
    %c0_1 = arith.constant 0 : index
    %0 = vector.load %arg2[%c0, %c0_0, %c0_1] : memref<1x8x8xf32, #tpu.memory_space<vmem>>, vector<1x8x8xf32>
    %1 = vector.shape_cast %0 : vector<1x8x8xf32> to vector<8x8xf32>
    %2 = vector.extract_strided_slice %1 {offsets = [4, 0], sizes = [4, 8], strides = [1, 1]} : vector<8x8xf32> to vector<4x8xf32>
    %c0_2 = arith.constant 0 : index
    %c0_3 = arith.constant 0 : index
    %c0_4 = arith.constant 0 : index
    %c0_5 = arith.constant 0 : index
    %3 = vector.load %arg6[%c0_2, %c0_3, %c0_4, %c0_5] : memref<1x1x4x1xf32, #tpu.memory_space<vmem>>, vector<1x1x4x1xf32>
    %4 = vector.shape_cast %3 : vector<1x1x4x1xf32> to vector<4x1xf32>
    %5 = vector.extract_strided_slice %2 {offsets = [0, 0], sizes = [4, 7], strides = [1, 1]} : vector<4x8xf32> to vector<4x7xf32>
    %6 = tpu.concatenate %4, %5 in 1 : vector<4x1xf32>, vector<4x7xf32> -> vector<4x8xf32>
    %c0_6 = arith.constant 0 : index
    %c0_7 = arith.constant 0 : index
    %7 = vector.load %arg3[%c0_6, %c0_7] : memref<4x8xf32, #tpu.memory_space<vmem>>, vector<4x8xf32>
    %cst = arith.constant dense<0.000000e+00> : vector<4x8xf32>
    %8 = tpu.matmul %7, %1, %cst {dimension_numbers = #tpu.dot_dimension_numbers<[1], [0], [0], [1], [0, 0, 1, 1], [], []>} : vector<4x8xf32>, vector<8x8xf32>, vector<4x8xf32> -> vector<4x8xf32>
    %c0_8 = arith.constant 0 : index
    %c0_9 = arith.constant 0 : index
    %9 = vector.load %arg4[%c0_8, %c0_9] : memref<4x4xf32, #tpu.memory_space<vmem>>, vector<4x4xf32>
    %cst_10 = arith.constant dense<0.000000e+00> : vector<4x8xf32>
    %10 = tpu.matmul %9, %6, %cst_10 {dimension_numbers = #tpu.dot_dimension_numbers<[1], [0], [0], [1], [0, 0, 1, 1], [], []>} : vector<4x4xf32>, vector<4x8xf32>, vector<4x8xf32> -> vector<4x8xf32>
    %11 = arith.addf %8, %10 : vector<4x8xf32>
    %c0_11 = arith.constant 0 : index
    %c0_12 = arith.constant 0 : index
    %12 = vector.load %arg5[%c0_11, %c0_12] : memref<4x1xf32, #tpu.memory_space<vmem>>, vector<4x1xf32>
    %13 = vector.broadcast %12 : vector<4x1xf32> to vector<4x8xf32>
    %14 = arith.addf %11, %13 : vector<4x8xf32>
    %c0_13 = arith.constant 0 : index
    %c0_14 = arith.constant 0 : index
    %c0_15 = arith.constant 0 : index
    %15 = vector.load %arg7[%c0_13, %c0_14, %c0_15] : memref<1x4x8xf32, #tpu.memory_space<vmem>>, vector<1x4x8xf32>
    %16 = vector.shape_cast %15 : vector<1x4x8xf32> to vector<4x8xf32>
    %17 = vector.shape_cast %14 : vector<4x8xf32> to vector<1x4x8xf32>
    tpu.vector_store %arg7[%c0_13, %c0_14, %c0_15], %17 {strides = array<i32>} : memref<1x4x8xf32, #tpu.memory_space<vmem>>, vector<1x4x8xf32>,
    return
  }
  func.func @transform_0(%arg0: i32, %arg1: i32) -> (i32, i32, i32) {
    %c0_i32 = arith.constant 0 : i32
    %c0_i32_0 = arith.constant 0 : i32
    return %arg0, %c0_i32, %arg1 : i32, i32, i32
  }
  func.func @transform_1(%arg0: i32, %arg1: i32) -> (i32, i32) {
    %c0_i32 = arith.constant 0 : i32
    %c0_i32_0 = arith.constant 0 : i32
    %c0_i32_1 = arith.constant 0 : i32
    return %c0_i32, %c0_i32_0 : i32, i32
  }
  func.func @transform_2(%arg0: i32, %arg1: i32) -> (i32, i32) {
    %c0_i32 = arith.constant 0 : i32
    %c0_i32_0 = arith.constant 0 : i32
    %c0_i32_1 = arith.constant 0 : i32
    return %c0_i32, %c0_i32_0 : i32, i32
  }
  func.func @transform_3(%arg0: i32, %arg1: i32) -> (i32, i32) {
    %c0_i32 = arith.constant 0 : i32
    %c0_i32_0 = arith.constant 0 : i32
    %c0_i32_1 = arith.constant 0 : i32
    return %c0_i32, %c0_i32_0 : i32, i32
  }
  func.func @transform_4(%arg0: i32, %arg1: i32) -> (i32, i32, i32, i32) {
    %c0_i32 = arith.constant 0 : i32
    %c0_i32_0 = arith.constant 0 : i32
    %c0_i32_1 = arith.constant 0 : i32
    return %arg0, %arg1, %c0_i32, %c0_i32_0 : i32, i32, i32, i32
  }
  func.func @transform_5(%arg0: i32, %arg1: i32) -> (i32, i32, i32) {
    %c0_i32 = arith.constant 0 : i32
    %c0_i32_0 = arith.constant 0 : i32
    return %arg0, %c0_i32, %arg1 : i32, i32, i32
  }
}

module attributes {stable_mosaic.version = 11 : i64} {
  func.func @conv1d_k3s2_kernel(%arg0: i32, %arg1: i32, %arg2: memref<1x8x8xf32, #tpu.memory_space<vmem>>, %arg3: memref<4x8xf32, #tpu.memory_space<vmem>>, %arg4: memref<4x4xf32, #tpu.memory_space<vmem>>, %arg5: memref<4x1xf32, #tpu.memory_space<vmem>>, %arg6: memref<1x1x4x1xf32, #tpu.memory_space<vmem>>, %arg7: memref<1x4x8xf32, #tpu.memory_space<vmem>>) attributes {dimension_semantics = [#tpu.dimension_semantics<parallel>, #tpu.dimension_semantics<parallel>], iteration_bounds = array<i64: 2, 1>, scalar_prefetch = 0 : i64, scratch_operands = 0 : i64, tpu.core_type = #tpu.core_type<tc>, window_params = [{transform_indices = @transform_0, window_bounds = array<i64: 1, 8, 8>}, {pipeline_mode = #tpu.pipeline_mode<synchronous>, transform_indices = @transform_1, window_bounds = array<i64: 4, 8>}, {pipeline_mode = #tpu.pipeline_mode<synchronous>, transform_indices = @transform_2, window_bounds = array<i64: 4, 4>}, {pipeline_mode = #tpu.pipeline_mode<synchronous>, transform_indices = @transform_3, window_bounds = array<i64: 4, 1>}, {transform_indices = @transform_4, window_bounds = array<i64: 1, 1, 4, 1>}, {transform_indices = @transform_5, window_bounds = array<i64: 1, 4, 8>}]} {
    %c0 = arith.constant 0 : index
    %c0_0 = arith.constant 0 : index
    %c0_1 = arith.constant 0 : index
    %0 = vector.load %arg2[%c0, %c0_0, %c0_1] : memref<1x8x8xf32, #tpu.memory_space<vmem>>, vector<1x8x8xf32>
    %1 = vector.shape_cast %0 : vector<1x8x8xf32> to vector<8x8xf32>
    %2 = vector.extract_strided_slice %1 {offsets = [4, 0], sizes = [4, 8], strides = [1, 1]} : vector<8x8xf32> to vector<4x8xf32>
    %c0_2 = arith.constant 0 : index
    %c0_3 = arith.constant 0 : index
    %c0_4 = arith.constant 0 : index
    %c0_5 = arith.constant 0 : index
    %3 = vector.load %arg6[%c0_2, %c0_3, %c0_4, %c0_5] : memref<1x1x4x1xf32, #tpu.memory_space<vmem>>, vector<1x1x4x1xf32>
    %4 = vector.shape_cast %3 : vector<1x1x4x1xf32> to vector<4x1xf32>
    %5 = vector.extract_strided_slice %2 {offsets = [0, 0], sizes = [4, 7], strides = [1, 1]} : vector<4x8xf32> to vector<4x7xf32>
    %6 = tpu.concatenate %4, %5 in 1 : vector<4x1xf32>, vector<4x7xf32> -> vector<4x8xf32>
    %c0_6 = arith.constant 0 : index
    %c0_7 = arith.constant 0 : index
    %7 = vector.load %arg3[%c0_6, %c0_7] : memref<4x8xf32, #tpu.memory_space<vmem>>, vector<4x8xf32>
    %cst = arith.constant dense<0.000000e+00> : vector<4x8xf32>
    %8 = tpu.matmul %7, %1, %cst {dimension_numbers = #tpu.dot_dimension_numbers<[1], [0], [0], [1], [0, 0, 1, 1], [], []>} : vector<4x8xf32>, vector<8x8xf32>, vector<4x8xf32> -> vector<4x8xf32>
    %c0_8 = arith.constant 0 : index
    %c0_9 = arith.constant 0 : index
    %9 = vector.load %arg4[%c0_8, %c0_9] : memref<4x4xf32, #tpu.memory_space<vmem>>, vector<4x4xf32>
    %cst_10 = arith.constant dense<0.000000e+00> : vector<4x8xf32>
    %10 = tpu.matmul %9, %6, %cst_10 {dimension_numbers = #tpu.dot_dimension_numbers<[1], [0], [0], [1], [0, 0, 1, 1], [], []>} : vector<4x4xf32>, vector<4x8xf32>, vector<4x8xf32> -> vector<4x8xf32>
    %11 = arith.addf %8, %10 : vector<4x8xf32>
    %c0_11 = arith.constant 0 : index
    %c0_12 = arith.constant 0 : index
    %12 = vector.load %arg5[%c0_11, %c0_12] : memref<4x1xf32, #tpu.memory_space<vmem>>, vector<4x1xf32>
    %13 = vector.broadcast %12 : vector<4x1xf32> to vector<4x8xf32>
    %14 = arith.addf %11, %13 : vector<4x8xf32>
    %c0_13 = arith.constant 0 : index
    %c0_14 = arith.constant 0 : index
    %c0_15 = arith.constant 0 : index
    %15 = vector.load %arg7[%c0_13, %c0_14, %c0_15] : memref<1x4x8xf32, #tpu.memory_space<vmem>>, vector<1x4x8xf32>
    %16 = vector.shape_cast %15 : vector<1x4x8xf32> to vector<4x8xf32>
    %17 = vector.shape_cast %14 : vector<4x8xf32> to vector<1x4x8xf32>
    tpu.vector_store %arg7[%c0_13, %c0_14, %c0_15], %17 {strides = array<i32>} : memref<1x4x8xf32, #tpu.memory_space<vmem>>, vector<1x4x8xf32>,
    return
  }
  func.func @transform_0(%arg0: i32, %arg1: i32) -> (i32, i32, i32) {
    %c0_i32 = arith.constant 0 : i32
    %c0_i32_0 = arith.constant 0 : i32
    return %arg0, %c0_i32, %arg1 : i32, i32, i32
  }
  func.func @transform_1(%arg0: i32, %arg1: i32) -> (i32, i32) {
    %c0_i32 = arith.constant 0 : i32
    %c0_i32_0 = arith.constant 0 : i32
    %c0_i32_1 = arith.constant 0 : i32
    return %c0_i32, %c0_i32_0 : i32, i32
  }
  func.func @transform_2(%arg0: i32, %arg1: i32) -> (i32, i32) {
    %c0_i32 = arith.constant 0 : i32
    %c0_i32_0 = arith.constant 0 : i32
    %c0_i32_1 = arith.constant 0 : i32
    return %c0_i32, %c0_i32_0 : i32, i32
  }
  func.func @transform_3(%arg0: i32, %arg1: i32) -> (i32, i32) {
    %c0_i32 = arith.constant 0 : i32
    %c0_i32_0 = arith.constant 0 : i32
    %c0_i32_1 = arith.constant 0 : i32
    return %c0_i32, %c0_i32_0 : i32, i32
  }
  func.func @transform_4(%arg0: i32, %arg1: i32) -> (i32, i32, i32, i32) {
    %c0_i32 = arith.constant 0 : i32
    %c0_i32_0 = arith.constant 0 : i32
    %c0_i32_1 = arith.constant 0 : i32
    return %arg0, %arg1, %c0_i32, %c0_i32_0 : i32, i32, i32, i32
  }
  func.func @transform_5(%arg0: i32, %arg1: i32) -> (i32, i32, i32) {
    %c0_i32 = arith.constant 0 : i32
    %c0_i32_0 = arith.constant 0 : i32
    return %arg0, %c0_i32, %arg1 : i32, i32, i32
  }
}

</mosaic_0001>

<llo_original>
// kernel: downsample1d.1
$region0: #{downsample1d.1}
  #allocation0 [shape = 'u32[]', space=smem, size = 0x4, offset = 0x4, fixed_abs, tag = 'smem constant byte address 0x4 - core index']
  #allocation1 [shape = 'u32[144,128]{1,0:T(1,128)}', space=vmem, size = 0x12000, scoped, tag = 'internal scratch']
  %s0 = inlined_call_operand.vmem [shape: f32[2,8,8], index: 0, kind: input, shape index: {}]
  %s1 = inlined_call_operand.vmem [shape: f32[4,8], index: 1, kind: input, shape index: {}]
  %s2 = inlined_call_operand.vmem [shape: f32[4,4], index: 2, kind: input, shape index: {}]
  %s3 = inlined_call_operand.vmem [shape: f32[4,1], index: 3, kind: input, shape index: {}]
  %s4 = inlined_call_operand.vmem [shape: f32[2,1,4,1], index: 4, kind: input, shape index: {}]
  %s5 = inlined_call_operand.hbm [shape: f32[2,4,8], index: 5, kind: output, shape index: {}]
  %s6 = sld [smem:[#allocation0]]
  $region53: #{downsample1d.1} parent=0
    _
  %s8 = ssub.s32 1, %s6
  %s9 = scalar_select 0, %s8, %s6
  $region1: #{downsample1d.1} parent=0
    #allocation2 [shape = 'u8[4096]{0}', space=vmem, size = 0x1000, scoped, tag = 'output window, operand 0']
    #allocation3 [shape = 's32[2]{0}', space=sflag, size = 0x8, scoped, tag = 'scoped memory for downsample1d.1']
    %10 = vsyncpa [#allocation3], 0
    %s11 = scalar_lea.sflag [#allocation3], 1
    %12 = vsyncpa %s11, 0
    loop: start=0, step=1, limit=4
    $region2: #{downsample1d.1} parent=1 // loop_pre_header
      _
    $region3: #{downsample1d.1} parent=1 // loop_header
      %s14 = sphi 0, %s18
      %p15 = scmp.ge.s32.totalorder %s14, 4
      %s21 = sphi 0, %s33
      %s22 = sphi 0, %s29
      %s23 = sphi 0, %s21
      %s24 = sphi 0, %s22
      %s25 = sphi 0, %s23
      %s26 = sphi 0, %s24
      %s38 = sphi 0, %s40
      %s41 = sphi 0, %s38
      %s42 = sphi 0, %s41
      %s58 = sphi 0, %s42
      %s62 = sphi 0, %s62
      %s64 = sphi 0, %s62
      %s65 = sphi 0, %s64
      %s79 = sphi 0, %s65
      %s83 = sphi 0, %s83
      %s85 = sphi 0, %s83
      %s86 = sphi 0, %s85
      %s100 = sphi 0, %s86
      %s104 = sphi 0, %s104
      %s106 = sphi 0, %s104
      %s107 = sphi 0, %s106
      %s121 = sphi 0, %s107
      %s129 = sphi 0, %s131
      %s132 = sphi 0, %s129
      %s133 = sphi 0, %s132
      %s149 = sphi 0, %s133
      %s157 = sphi 0, %s159
      %s160 = sphi 0, %s157
      %s161 = sphi 0, %s160
      %s177 = sphi 0, %s161
    $region4: #{downsample1d.1} parent=1 // loop_header_branch
      %17 = sbr.rel (%p15) target = $region8
    $region5: #{downsample1d.1} parent=1 // loop_body
      %s19 = ssub.s32 %s14, 1
      %s20 = ssub.s32 %s14, 2
      %s27 = sadd.s32 1, %s22
      %p28 = scmp.ge.s32.totalorder %s27, 1
      %s29 = scalar_select %p28, 0, %s27
      %s30 = sadd.s32 1, %s21
      %s31 = scalar_select %p28, %s30, %s21
      %p32 = scmp.ge.s32.totalorder %s31, 2
      %s33 = scalar_select %p32, 0, %s31
      %s34 = ssub.s32 %s21, %s33
      %s35 = ssub.s32 %s22, %s29
      %s36 = sor.u32 %s34, %s35
      %p37 = scmp.eq.s32.totalorder %s36, 0
      %s39 = sadd.s32 %s38, 1
      %s40 = scalar_select %p37, %s38, %s39
      %p43 = pneg %p37
      %p44 = scmp.eq.s32.totalorder %s14, 1
      %p45 = por %p43, %p44
      %p46 = scmp.ne.s32.totalorder %s38, %s41
      %p47 = scmp.eq.s32.totalorder %s14, 0
      %p48 = por %p46, %p47
      %p49 = scmp.ne.s32.totalorder %s38, %s41
      %p50 = scmp.eq.s32.totalorder %s19, 1
      %p51 = por %p49, %p50
      %p52 = scmp.ne.s32.totalorder %s41, %s42
      %p53 = scmp.eq.s32.totalorder %s19, 0
      %p54 = por %p52, %p53
      %p55 = scmp.ne.s32.totalorder %s41, %s42
      %p56 = scmp.eq.s32.totalorder %s20, 1
      %p57 = por %p55, %p56
      %p59 = scmp.ne.s32.totalorder %s42, %s58
      %p60 = scmp.eq.s32.totalorder %s20, 0
      %p61 = por %p59, %p60
      %s63 = sadd.s32 %s62, 1
      %p66 = scmp.eq.s32.totalorder %s14, 1
      %p67 = scmp.ne.s32.totalorder %s62, %s64
      %p68 = scmp.eq.s32.totalorder %s14, 0
      %p69 = por %p67, %p68
      %p70 = scmp.ne.s32.totalorder %s62, %s64
      %p71 = scmp.eq.s32.totalorder %s19, 1
      %p72 = por %p70, %p71
      %p73 = scmp.ne.s32.totalorder %s64, %s65
      %p74 = scmp.eq.s32.totalorder %s19, 0
      %p75 = por %p73, %p74
      %p76 = scmp.ne.s32.totalorder %s64, %s65
      %p77 = scmp.eq.s32.totalorder %s20, 1
      %p78 = por %p76, %p77
      %p80 = scmp.ne.s32.totalorder %s65, %s79
      %p81 = scmp.eq.s32.totalorder %s20, 0
      %p82 = por %p80, %p81
      %s84 = sadd.s32 %s83, 1
      %p87 = scmp.eq.s32.totalorder %s14, 1
      %p88 = scmp.ne.s32.totalorder %s83, %s85
      %p89 = scmp.eq.s32.totalorder %s14, 0
      %p90 = por %p88, %p89
      %p91 = scmp.ne.s32.totalorder %s83, %s85
      %p92 = scmp.eq.s32.totalorder %s19, 1
      %p93 = por %p91, %p92
      %p94 = scmp.ne.s32.totalorder %s85, %s86
      %p95 = scmp.eq.s32.totalorder %s19, 0
      %p96 = por %p94, %p95
      %p97 = scmp.ne.s32.totalorder %s85, %s86
      %p98 = scmp.eq.s32.totalorder %s20, 1
      %p99 = por %p97, %p98
      %p101 = scmp.ne.s32.totalorder %s86, %s100
      %p102 = scmp.eq.s32.totalorder %s20, 0
      %p103 = por %p101, %p102
      %s105 = sadd.s32 %s104, 1
      %p108 = scmp.eq.s32.totalorder %s14, 1
      %p109 = scmp.ne.s32.totalorder %s104, %s106
      %p110 = scmp.eq.s32.totalorder %s14, 0
      %p111 = por %p109, %p110
      %p112 = scmp.ne.s32.totalorder %s104, %s106
      %p113 = scmp.eq.s32.totalorder %s19, 1
      %p114 = por %p112, %p113
      %p115 = scmp.ne.s32.totalorder %s106, %s107
      %p116 = scmp.eq.s32.totalorder %s19, 0
      %p117 = por %p115, %p116
      %p118 = scmp.ne.s32.totalorder %s106, %s107
      %p119 = scmp.eq.s32.totalorder %s20, 1
      %p120 = por %p118, %p119
      %p122 = scmp.ne.s32.totalorder %s107, %s121
      %p123 = scmp.eq.s32.totalorder %s20, 0
      %p124 = por %p122, %p123
      %s125 = ssub.s32 %s21, %s33
      %s126 = ssub.s32 %s22, %s29
      %s127 = sor.u32 %s125, %s126
      %p128 = scmp.eq.s32.totalorder %s127, 0
      %s130 = sadd.s32 %s129, 1
      %s131 = scalar_select %p128, %s129, %s130
      %p134 = pneg %p128
      %p135 = scmp.eq.s32.totalorder %s14, 1
      %p136 = por %p134, %p135
      %p137 = scmp.ne.s32.totalorder %s129, %s132
      %p138 = scmp.eq.s32.totalorder %s14, 0
      %p139 = por %p137, %p138
      %p140 = scmp.ne.s32.totalorder %s129, %s132
      %p141 = scmp.eq.s32.totalorder %s19, 1
      %p142 = por %p140, %p141
      %p143 = scmp.ne.s32.totalorder %s132, %s133
      %p144 = scmp.eq.s32.totalorder %s19, 0
      %p145 = por %p143, %p144
      %p146 = scmp.ne.s32.totalorder %s132, %s133
      %p147 = scmp.eq.s32.totalorder %s20, 1
      %p148 = por %p146, %p147
      %p150 = scmp.ne.s32.totalorder %s133, %s149
      %p151 = scmp.eq.s32.totalorder %s20, 0
      %p152 = por %p150, %p151
      %s153 = ssub.s32 %s21, %s33
      %s154 = ssub.s32 %s22, %s29
      %s155 = sor.u32 %s153, %s154
      %p156 = scmp.eq.s32.totalorder %s155, 0
      %s158 = sadd.s32 %s157, 1
      %s159 = scalar_select %p156, %s157, %s158
      %p162 = pneg %p156
      %p163 = scmp.eq.s32.totalorder %s14, 1
      %p164 = por %p162, %p163
      %p165 = scmp.ne.s32.totalorder %s157, %s160
      %p166 = scmp.eq.s32.totalorder %s14, 0
      %p167 = por %p165, %p166
      %p168 = scmp.ne.s32.totalorder %s157, %s160
      %p169 = scmp.eq.s32.totalorder %s19, 1
      %p170 = por %p168, %p169
      %p171 = scmp.ne.s32.totalorder %s160, %s161
      %p172 = scmp.eq.s32.totalorder %s19, 0
      %p173 = por %p171, %p172
      %p174 = scmp.ne.s32.totalorder %s160, %s161
      %p175 = scmp.eq.s32.totalorder %s20, 1
      %p176 = por %p174, %p175
      %p178 = scmp.ne.s32.totalorder %s161, %s177
      %p179 = scmp.eq.s32.totalorder %s20, 0
      %p180 = por %p178, %p179
      %p181 = scmp.le.s32.totalorder 1, %s14
      %p182 = scmp.lt.s32.totalorder %s14, 3
      %p183 = pnand %p181, %p182
      %p184 = pneg %p183
      // Predicated region
      $region9: #{downsample1d.1} parent=5 // pred_check
        _
      $region10: #{downsample1d.1} parent=5 // pred_check_branch
        %186 = sbr.rel (%p183) target = $region12
      $region11: #{downsample1d.1} parent=5 // pred_region
        %s187 = ssub.s32 %s14, 1
        // Predicated region
        $region13: #{downsample1d.1} parent=11 // pred_check
          %p188 = pneg %p75
        $region14: #{downsample1d.1} parent=11 // pred_check_branch
          %190 = sbr.rel (%p188) target = $region16
        $region15: #{downsample1d.1} parent=11 // pred_region
          _
        $region16: #{downsample1d.1} parent=11 // pred_fallthru
          _
        // Predicated region
        $region17: #{downsample1d.1} parent=11 // pred_check
          %p191 = pneg %p96
        $region18: #{downsample1d.1} parent=11 // pred_check_branch
          %193 = sbr.rel (%p191) target = $region20
        $region19: #{downsample1d.1} parent=11 // pred_region
          _
        $region20: #{downsample1d.1} parent=11 // pred_fallthru
          _
        // Predicated region
        $region21: #{downsample1d.1} parent=11 // pred_check
          %p194 = pneg %p117
        $region22: #{downsample1d.1} parent=11 // pred_check_branch
          %196 = sbr.rel (%p194) target = $region24
        $region23: #{downsample1d.1} parent=11 // pred_region
          _
        $region24: #{downsample1d.1} parent=11 // pred_fallthru
          _
      $region12: #{downsample1d.1} parent=5 // pred_fallthru
        _
      %p197 = scmp.lt.s32.totalorder %s14, 2
      // Predicated region
      $region25: #{downsample1d.1} parent=5 // pred_check
        %p198 = pneg %p197
      $region26: #{downsample1d.1} parent=5 // pred_check_branch
        %200 = sbr.rel (%p198) target = $region28
      $region27: #{downsample1d.1} parent=5 // pred_region
        // Predicated region
        $region29: #{downsample1d.1} parent=27 // pred_check
          %p201 = pneg %p48
        $region30: #{downsample1d.1} parent=27 // pred_check_branch
          %203 = sbr.rel (%p201) target = $region32
        $region31: #{downsample1d.1} parent=27 // pred_region
          %p204 = scmp.lt.s32.totalorder %s21, 1
          %s205 = scalar_select %p204, %s21, 1
          %p206 = scmp.lt.s32.totalorder %s22, 0
          %s207 = scalar_select %p206, %s22, 0
          %s208 = sadd.s32 %s207, %s205
          %s209 = smul.addr %s208, 8
          %s210 = scalar_lea.vmem %s0, %s209
        $region32: #{downsample1d.1} parent=27 // pred_fallthru
          _
        // Predicated region
        $region33: #{downsample1d.1} parent=27 // pred_check
          %p211 = pneg %p139
        $region34: #{downsample1d.1} parent=27 // pred_check_branch
          %213 = sbr.rel (%p211) target = $region36
        $region35: #{downsample1d.1} parent=27 // pred_region
          %p214 = scmp.lt.s32.totalorder %s21, 1
          %s215 = scalar_select %p214, %s21, 1
          %p216 = scmp.lt.s32.totalorder %s22, 0
          %s217 = scalar_select %p216, %s22, 0
          %s218 = sadd.s32 %s217, %s215
          %s219 = smul.addr %s218, 4
          %s220 = scalar_lea.vmem %s4, %s219
        $region36: #{downsample1d.1} parent=27 // pred_fallthru
          _
      $region28: #{downsample1d.1} parent=5 // pred_fallthru
        _
      %p221 = scmp.le.s32.totalorder 1, %s14
      %p222 = scmp.lt.s32.totalorder %s14, 3
      %p223 = pnand %p221, %p222
      %p224 = pneg %p223
      // Predicated region
      $region37: #{downsample1d.1} parent=5 // pred_check
        _
      $region38: #{downsample1d.1} parent=5 // pred_check_branch
        %226 = sbr.rel (%p223) target = $region40
      $region39: #{downsample1d.1} parent=5 // pred_region
        %s227 = ssub.s32 %s14, 1
        %p228 = scmp.lt.s32.totalorder %s23, 1
        %s229 = scalar_select %p228, %s23, 1
        %p230 = scmp.lt.s32.totalorder %s24, 0
        %s231 = scalar_select %p230, %s24, 0
        %s232 = sadd.s32 %s231, %s229
        %s233 = smul.addr %s232, 8
        %s234 = scalar_lea.vmem %s0, %s233
        %p235 = pneg %p54
        %p236 = pneg %p51
        %p237 = pneg %p75
        %p238 = pneg %p72
        %p239 = pneg %p96
        %p240 = pneg %p93
        %p241 = pneg %p117
        %p242 = pneg %p114
        %p243 = scmp.lt.s32.totalorder %s23, 1
        %s244 = scalar_select %p243, %s23, 1
        %p245 = scmp.lt.s32.totalorder %s24, 0
        %s246 = scalar_select %p245, %s24, 0
        %s247 = sadd.s32 %s246, %s244
        %s248 = smul.addr %s247, 4
        %s249 = scalar_lea.vmem %s4, %s248
        %p250 = pneg %p145
        %p251 = pneg %p142
        %p252 = pneg %p173
        %p253 = pneg %p170
        %s254 = sand.u32 %s160, 1
        %s255 = scalar_lea.sflag [#allocation3], %s254
        %s256 = sand.u32 %s160, 1
        %s257 = smul.addr %s256, 4
        %s258 = scalar_lea.vmem [#allocation2], %s257
        %p259 = scmp.lt.s32.totalorder %s23, 1
        %s260 = scalar_select %p259, %s23, 1
        %p261 = scmp.lt.s32.totalorder %s24, 0
        %s262 = scalar_select %p261, %s24, 0
        %s263 = sadd.s32 %s262, %s260
        %s264 = smul.addr %s263, 8
        %s265 = scalar_lea.vmem %s0, %s264
        %p266 = scmp.lt.s32.totalorder %s23, 1
        %s267 = scalar_select %p266, %s23, 1
        %p268 = scmp.lt.s32.totalorder %s24, 0
        %s269 = scalar_select %p268, %s24, 0
        %s270 = sadd.s32 %s269, %s267
        %s271 = smul.addr %s270, 4
        %s272 = scalar_lea.vmem %s4, %s271
        %v273 = vld [vmem:[%s265] sm:$0xff]
        %v274 = vld [vmem:[%s272] sm:$0xf]
        %v276 = vrot.slane %v273, 4
        %277 = vrot.lane.b32.xlu0 %v276, 1
        %v278 = vpop.permute.xlu0 %277
        %vm280 = vcmask 7168
        %v281 = vsel %vm280, %v274, %v278
        %v282 = vld [vmem:[%s1] sm:$0xf]
        %v283 = vld [vmem:[%s2] sm:$0xf]
        %vm284 = vcmask 31744
        %v286 = vsel %vm284, %v283, 0
        %vm288 = vcmask 1043456
        %v290 = vsel %vm288, %v281, 0
        %292 = vmatprep.subr.mxu0 0.0
        %293 = vmatpush1.msra.mxu0 %v290
        %294 = vmatprep.subr.mxu0 0.0
        %295 = vmatpush1.msra.mxu0 0.0
        %296 = vmatprep.subr.mxu0 0.0
        %297 = vmatpush1.msra.mxu0 0.0
        %298 = vmatprep.subr.mxu0 0.0
        %299 = vmatpush1.msra.mxu0 0.0
        %300 = vmatprep.subr.mxu0 0.0
        %301 = vmatpush1.msra.mxu0 0.0
        %302 = vmatprep.subr.mxu0 0.0
        %303 = vmatpush1.msra.mxu0 0.0
        %304 = vmatprep.subr.mxu0 0.0
        %305 = vmatpush1.msra.mxu0 0.0
        %306 = vmatprep.subr.mxu0 0.0
        %307 = vmatpush1.msra.mxu0 0.0
        %308 = vmatprep.subr.mxu0 0.0
        %309 = vmatpush1.msra.mxu0 0.0
        %310 = vmatprep.subr.mxu0 0.0
        %311 = vmatpush1.msra.mxu0 0.0
        %312 = vmatprep.subr.mxu0 0.0
        %313 = vmatpush1.msra.mxu0 0.0
        %314 = vmatprep.subr.mxu0 0.0
        %315 = vmatpush1.msra.mxu0 0.0
        %316 = vmatprep.subr.mxu0 0.0
        %317 = vmatpush1.msra.mxu0 0.0
        %318 = vmatprep.subr.mxu0 0.0
        %319 = vmatpush1.msra.mxu0 0.0
        %320 = vmatprep.subr.mxu0 0.0
        %321 = vmatpush1.msra.mxu0 0.0
        %322 = vmatprep.subr.mxu0 0.0
        %323 = vmatpush1.msra.mxu0 0.0
        %324 = vmatprep.subr.mxu0 0.0
        %325 = vmatpush1.msra.mxu0 0.0
        %326 = vmatprep.subr.mxu0 0.0
        %327 = vmatpush1.msra.mxu0 0.0
        %328 = vmatprep.subr.mxu0 0.0
        %329 = vmatpush1.msra.mxu0 0.0
        %330 = vmatprep.subr.mxu0 0.0
        %331 = vmatpush1.msra.mxu0 0.0
        %332 = vmatprep.subr.mxu0 0.0
        %333 = vmatpush1.msra.mxu0 0.0
        %334 = vmatprep.subr.mxu0 0.0
        %335 = vmatpush1.msra.mxu0 0.0
        %336 = vmatprep.subr.mxu0 0.0
        %337 = vmatpush1.msra.mxu0 0.0
        %338 = vmatprep.subr.mxu0 0.0
        %339 = vmatpush1.msra.mxu0 0.0
        %340 = vmatprep.subr.mxu0 0.0
        %341 = vmatpush1.msra.mxu0 0.0
        %342 = vmatprep.subr.mxu0 0.0
        %343 = vmatpush1.msra.mxu0 0.0
        %344 = vmatprep.subr.mxu0 0.0
        %345 = vmatpush1.msra.mxu0 0.0
        %346 = vmatprep.subr.mxu0 0.0
        %347 = vmatpush1.msra.mxu0 0.0
        %348 = vmatprep.subr.mxu0 0.0
        %349 = vmatpush1.msra.mxu0 0.0
        %350 = vmatprep.subr.mxu0 0.0
        %351 = vmatpush1.msra.mxu0 0.0
        %352 = vmatprep.subr.mxu0 0.0
        %353 = vmatpush1.msra.mxu0 0.0
        %354 = vmatprep.subr.mxu0 0.0
        %355 = vmatpush1.msra.mxu0 0.0
        %356 = vmatprep.mubr.f32.mxu0 0.0
        %357 = vmatmul.mubr.f32.gmra.mrb[0].mxu0 %v286
        %v358 = vpop.f32.mrb[0].mxu0
        %v359 = vadd.f32 0.0, %v358
        %v360 = vpop.f32.mrb[0].mxu0
        %361 = vdwg.mxu0
        %vm362 = vcmask 64512
        %v364 = vsel %vm362, %v282, 0
        %366 = vmatprep.subr.mxu0 0.0
        %367 = vmatpush1.msra.mxu0 %v273
        %368 = vmatprep.subr.mxu0 0.0
        %369 = vmatpush1.msra.mxu0 0.0
        %370 = vmatprep.subr.mxu0 0.0
        %371 = vmatpush1.msra.mxu0 0.0
        %372 = vmatprep.subr.mxu0 0.0
        %373 = vmatpush1.msra.mxu0 0.0
        %374 = vmatprep.subr.mxu0 0.0
        %375 = vmatpush1.msra.mxu0 0.0
        %376 = vmatprep.subr.mxu0 0.0
        %377 = vmatpush1.msra.mxu0 0.0
        %378 = vmatprep.subr.mxu0 0.0
        %379 = vmatpush1.msra.mxu0 0.0
        %380 = vmatprep.subr.mxu0 0.0
        %381 = vmatpush1.msra.mxu0 0.0
        %382 = vmatprep.subr.mxu0 0.0
        %383 = vmatpush1.msra.mxu0 0.0
        %384 = vmatprep.subr.mxu0 0.0
        %385 = vmatpush1.msra.mxu0 0.0
        %386 = vmatprep.subr.mxu0 0.0
        %387 = vmatpush1.msra.mxu0 0.0
        %388 = vmatprep.subr.mxu0 0.0
        %389 = vmatpush1.msra.mxu0 0.0
        %390 = vmatprep.subr.mxu0 0.0
        %391 = vmatpush1.msra.mxu0 0.0
        %392 = vmatprep.subr.mxu0 0.0
        %393 = vmatpush1.msra.mxu0 0.0
        %394 = vmatprep.subr.mxu0 0.0
        %395 = vmatpush1.msra.mxu0 0.0
        %396 = vmatprep.subr.mxu0 0.0
        %397 = vmatpush1.msra.mxu0 0.0
        %398 = vmatprep.subr.mxu0 0.0
        %399 = vmatpush1.msra.mxu0 0.0
        %400 = vmatprep.subr.mxu0 0.0
        %401 = vmatpush1.msra.mxu0 0.0
        %402 = vmatprep.subr.mxu0 0.0
        %403 = vmatpush1.msra.mxu0 0.0
        %404 = vmatprep.subr.mxu0 0.0
        %405 = vmatpush1.msra.mxu0 0.0
        %406 = vmatprep.subr.mxu0 0.0
        %407 = vmatpush1.msra.mxu0 0.0
        %408 = vmatprep.subr.mxu0 0.0
        %409 = vmatpush1.msra.mxu0 0.0
        %410 = vmatprep.subr.mxu0 0.0
        %411 = vmatpush1.msra.mxu0 0.0
        %412 = vmatprep.subr.mxu0 0.0
        %413 = vmatpush1.msra.mxu0 0.0
        %414 = vmatprep.subr.mxu0 0.0
        %415 = vmatpush1.msra.mxu0 0.0
        %416 = vmatprep.subr.mxu0 0.0
        %417 = vmatpush1.msra.mxu0 0.0
        %418 = vmatprep.subr.mxu0 0.0
        %419 = vmatpush1.msra.mxu0 0.0
        %420 = vmatprep.subr.mxu0 0.0
        %421 = vmatpush1.msra.mxu0 0.0
        %422 = vmatprep.subr.mxu0 0.0
        %423 = vmatpush1.msra.mxu0 0.0
        %424 = vmatprep.subr.mxu0 0.0
        %425 = vmatpush1.msra.mxu0 0.0
        %426 = vmatprep.subr.mxu0 0.0
        %427 = vmatpush1.msra.mxu0 0.0
        %428 = vmatprep.subr.mxu0 0.0
        %429 = vmatpush1.msra.mxu0 0.0
        %430 = vmatprep.mubr.f32.mxu0 0.0
        %431 = vmatmul.mubr.f32.gmra.mrb[0].mxu0 %v364
        %v432 = vpop.f32.mrb[0].mxu0
        %v433 = vadd.f32 %v359, %v432
        %v434 = vpop.f32.mrb[0].mxu0
        %435 = vdwg.mxu0
        %v436 = vld [vmem:[%s3] sm:$0xf]
        %438 = vset.pattern.permute.xlu0 0
        %439 = vperm.xlu0 %438, %v436
        %v440 = vpop.permute.xlu0 %439
        %v442 = vadd.f32 %v433, %v440
        %vm443 = vcmask 60416
        %444 = vst.msk [vmem:[%s258] sm:$0xf] %vm443, %v442
        %s445 = sand.u32 %s160, 1
        %s446 = scalar_lea.sflag [#allocation3], %s445
        %s447 = sand.u32 %s160, 1
        %s448 = smul.addr %s447, 4
        %s449 = scalar_lea.vmem [#allocation2], %s448
        // Predicated region
        $region41: #{downsample1d.1} parent=39 // pred_check
          %p450 = pneg %p170
        $region42: #{downsample1d.1} parent=39 // pred_check_branch
          %452 = sbr.rel (%p450) target = $region44
        $region43: #{downsample1d.1} parent=39 // pred_region
          %s454 = ssub.s32 64, 64
          %455 = vsyncadd %s446, %s454
          %s456 = sadd.s32 %s24, %s23
          %s457 = smul.addr %s456, 64
          %s458 = scalar_lea.hbm %s5, %s457
          %s460 = sshll.u32 %s449, 4
          %s461 = int_to_ptr.vmem [resolvable:$true] %s460
          %463 = dma.vmem_to_hbm [thread:$0]  %s461, 64, %s458, %s446
        $region44: #{downsample1d.1} parent=39 // pred_fallthru
          _
      $region40: #{downsample1d.1} parent=5 // pred_fallthru
        _
      %p464 = scmp.le.s32.totalorder 2, %s14
      // Predicated region
      $region45: #{downsample1d.1} parent=5 // pred_check
        %p465 = pneg %p464
      $region46: #{downsample1d.1} parent=5 // pred_check_branch
        %467 = sbr.rel (%p465) target = $region48
      $region47: #{downsample1d.1} parent=5 // pred_region
        %s468 = ssub.s32 %s14, 2
        // Predicated region
        $region49: #{downsample1d.1} parent=47 // pred_check
          %p469 = pneg %p176
        $region50: #{downsample1d.1} parent=47 // pred_check_branch
          %471 = sbr.rel (%p469) target = $region52
        $region51: #{downsample1d.1} parent=47 // pred_region
          %s472 = sand.u32 %s161, 1
          %s473 = scalar_lea.sflag [#allocation3], %s472
          %s474 = sand.u32 %s161, 1
          %s475 = smul.addr %s474, 4
          %s476 = scalar_lea.vmem [#allocation2], %s475
          %477 = dma.done %s473, 64
        $region52: #{downsample1d.1} parent=47 // pred_fallthru
          _
      $region48: #{downsample1d.1} parent=5 // pred_fallthru
        _
    $region6: #{downsample1d.1} parent=1 // loop_footer
      %s18 = sadd.s32 1, %s14
    $region7: #{downsample1d.1} parent=1 // loop_footer_branch
      %13 = sbr.rel target = $region3
    $region8: #{downsample1d.1} parent=1 // loop_exit
      _
    %478 = vsyncpa [#allocation3], 1
    %s479 = scalar_lea.sflag [#allocation3], 1
    %480 = vsyncpa %s479, 1

// kernel: downsample1d.1
$region0: #{downsample1d.1}
  #allocation0 [shape = 'u32[]', space=smem, size = 0x4, offset = 0x4, fixed_abs, tag = 'smem constant byte address 0x4 - core index']
  #allocation1 [shape = 'u32[144,128]{1,0:T(1,128)}', space=vmem, size = 0x12000, scoped, tag = 'internal scratch']
  %s0 = inlined_call_operand.vmem [shape: f32[2,8,8], index: 0, kind: input, shape index: {}]
  %s1 = inlined_call_operand.vmem [shape: f32[4,8], index: 1, kind: input, shape index: {}]
  %s2 = inlined_call_operand.vmem [shape: f32[4,4], index: 2, kind: input, shape index: {}]
  %s3 = inlined_call_operand.vmem [shape: f32[4,1], index: 3, kind: input, shape index: {}]
  %s4 = inlined_call_operand.vmem [shape: f32[2,1,4,1], index: 4, kind: input, shape index: {}]
  %s5 = inlined_call_operand.hbm [shape: f32[2,4,8], index: 5, kind: output, shape index: {}]
  %s6 = sld [smem:[#allocation0]]
  $region53: #{downsample1d.1} parent=0
    _
  %s8 = ssub.s32 1, %s6
  %s9 = scalar_select 0, %s8, %s6
  $region1: #{downsample1d.1} parent=0
    #allocation2 [shape = 'u8[4096]{0}', space=vmem, size = 0x1000, scoped, tag = 'output window, operand 0']
    #allocation3 [shape = 's32[2]{0}', space=sflag, size = 0x8, scoped, tag = 'scoped memory for downsample1d.1']
    %10 = vsyncpa [#allocation3], 0
    %s11 = scalar_lea.sflag [#allocation3], 1
    %12 = vsyncpa %s11, 0
    loop: start=0, step=1, limit=4
    $region2: #{downsample1d.1} parent=1 // loop_pre_header
      _
    $region3: #{downsample1d.1} parent=1 // loop_header
      %s14 = sphi 0, %s18
      %p15 = scmp.ge.s32.totalorder %s14, 4
      %s21 = sphi 0, %s33
      %s22 = sphi 0, %s29
      %s23 = sphi 0, %s21
      %s24 = sphi 0, %s22
      %s25 = sphi 0, %s23
      %s26 = sphi 0, %s24
      %s38 = sphi 0, %s40
      %s41 = sphi 0, %s38
      %s42 = sphi 0, %s41
      %s58 = sphi 0, %s42
      %s62 = sphi 0, %s62
      %s64 = sphi 0, %s62
      %s65 = sphi 0, %s64
      %s79 = sphi 0, %s65
      %s83 = sphi 0, %s83
      %s85 = sphi 0, %s83
      %s86 = sphi 0, %s85
      %s100 = sphi 0, %s86
      %s104 = sphi 0, %s104
      %s106 = sphi 0, %s104
      %s107 = sphi 0, %s106
      %s121 = sphi 0, %s107
      %s129 = sphi 0, %s131
      %s132 = sphi 0, %s129
      %s133 = sphi 0, %s132
      %s149 = sphi 0, %s133
      %s157 = sphi 0, %s159
      %s160 = sphi 0, %s157
      %s161 = sphi 0, %s160
      %s177 = sphi 0, %s161
    $region4: #{downsample1d.1} parent=1 // loop_header_branch
      %17 = sbr.rel (%p15) target = $region8
    $region5: #{downsample1d.1} parent=1 // loop_body
      %s19 = ssub.s32 %s14, 1
      %s20 = ssub.s32 %s14, 2
      %s27 = sadd.s32 1, %s22
      %p28 = scmp.ge.s32.totalorder %s27, 1
      %s29 = scalar_select %p28, 0, %s27
      %s30 = sadd.s32 1, %s21
      %s31 = scalar_select %p28, %s30, %s21
      %p32 = scmp.ge.s32.totalorder %s31, 2
      %s33 = scalar_select %p32, 0, %s31
      %s34 = ssub.s32 %s21, %s33
      %s35 = ssub.s32 %s22, %s29
      %s36 = sor.u32 %s34, %s35
      %p37 = scmp.eq.s32.totalorder %s36, 0
      %s39 = sadd.s32 %s38, 1
      %s40 = scalar_select %p37, %s38, %s39
      %p43 = pneg %p37
      %p44 = scmp.eq.s32.totalorder %s14, 1
      %p45 = por %p43, %p44
      %p46 = scmp.ne.s32.totalorder %s38, %s41
      %p47 = scmp.eq.s32.totalorder %s14, 0
      %p48 = por %p46, %p47
      %p49 = scmp.ne.s32.totalorder %s38, %s41
      %p50 = scmp.eq.s32.totalorder %s19, 1
      %p51 = por %p49, %p50
      %p52 = scmp.ne.s32.totalorder %s41, %s42
      %p53 = scmp.eq.s32.totalorder %s19, 0
      %p54 = por %p52, %p53
      %p55 = scmp.ne.s32.totalorder %s41, %s42
      %p56 = scmp.eq.s32.totalorder %s20, 1
      %p57 = por %p55, %p56
      %p59 = scmp.ne.s32.totalorder %s42, %s58
      %p60 = scmp.eq.s32.totalorder %s20, 0
      %p61 = por %p59, %p60
      %s63 = sadd.s32 %s62, 1
      %p66 = scmp.eq.s32.totalorder %s14, 1
      %p67 = scmp.ne.s32.totalorder %s62, %s64
      %p68 = scmp.eq.s32.totalorder %s14, 0
      %p69 = por %p67, %p68
      %p70 = scmp.ne.s32.totalorder %s62, %s64
      %p71 = scmp.eq.s32.totalorder %s19, 1
      %p72 = por %p70, %p71
      %p73 = scmp.ne.s32.totalorder %s64, %s65
      %p74 = scmp.eq.s32.totalorder %s19, 0
      %p75 = por %p73, %p74
      %p76 = scmp.ne.s32.totalorder %s64, %s65
      %p77 = scmp.eq.s32.totalorder %s20, 1
      %p78 = por %p76, %p77
      %p80 = scmp.ne.s32.totalorder %s65, %s79
      %p81 = scmp.eq.s32.totalorder %s20, 0
      %p82 = por %p80, %p81
      %s84 = sadd.s32 %s83, 1
      %p87 = scmp.eq.s32.totalorder %s14, 1
      %p88 = scmp.ne.s32.totalorder %s83, %s85
      %p89 = scmp.eq.s32.totalorder %s14, 0
      %p90 = por %p88, %p89
      %p91 = scmp.ne.s32.totalorder %s83, %s85
      %p92 = scmp.eq.s32.totalorder %s19, 1
      %p93 = por %p91, %p92
      %p94 = scmp.ne.s32.totalorder %s85, %s86
      %p95 = scmp.eq.s32.totalorder %s19, 0
      %p96 = por %p94, %p95
      %p97 = scmp.ne.s32.totalorder %s85, %s86
      %p98 = scmp.eq.s32.totalorder %s20, 1
      %p99 = por %p97, %p98
      %p101 = scmp.ne.s32.totalorder %s86, %s100
      %p102 = scmp.eq.s32.totalorder %s20, 0
      %p103 = por %p101, %p102
      %s105 = sadd.s32 %s104, 1
      %p108 = scmp.eq.s32.totalorder %s14, 1
      %p109 = scmp.ne.s32.totalorder %s104, %s106
      %p110 = scmp.eq.s32.totalorder %s14, 0
      %p111 = por %p109, %p110
      %p112 = scmp.ne.s32.totalorder %s104, %s106
      %p113 = scmp.eq.s32.totalorder %s19, 1
      %p114 = por %p112, %p113
      %p115 = scmp.ne.s32.totalorder %s106, %s107
      %p116 = scmp.eq.s32.totalorder %s19, 0
      %p117 = por %p115, %p116
      %p118 = scmp.ne.s32.totalorder %s106, %s107
      %p119 = scmp.eq.s32.totalorder %s20, 1
      %p120 = por %p118, %p119
      %p122 = scmp.ne.s32.totalorder %s107, %s121
      %p123 = scmp.eq.s32.totalorder %s20, 0
      %p124 = por %p122, %p123
      %s125 = ssub.s32 %s21, %s33
      %s126 = ssub.s32 %s22, %s29
      %s127 = sor.u32 %s125, %s126
      %p128 = scmp.eq.s32.totalorder %s127, 0
      %s130 = sadd.s32 %s129, 1
      %s131 = scalar_select %p128, %s129, %s130
      %p134 = pneg %p128
      %p135 = scmp.eq.s32.totalorder %s14, 1
      %p136 = por %p134, %p135
      %p137 = scmp.ne.s32.totalorder %s129, %s132
      %p138 = scmp.eq.s32.totalorder %s14, 0
      %p139 = por %p137, %p138
      %p140 = scmp.ne.s32.totalorder %s129, %s132
      %p141 = scmp.eq.s32.totalorder %s19, 1
      %p142 = por %p140, %p141
      %p143 = scmp.ne.s32.totalorder %s132, %s133
      %p144 = scmp.eq.s32.totalorder %s19, 0
      %p145 = por %p143, %p144
      %p146 = scmp.ne.s32.totalorder %s132, %s133
      %p147 = scmp.eq.s32.totalorder %s20, 1
      %p148 = por %p146, %p147
      %p150 = scmp.ne.s32.totalorder %s133, %s149
      %p151 = scmp.eq.s32.totalorder %s20, 0
      %p152 = por %p150, %p151
      %s153 = ssub.s32 %s21, %s33
      %s154 = ssub.s32 %s22, %s29
      %s155 = sor.u32 %s153, %s154
      %p156 = scmp.eq.s32.totalorder %s155, 0
      %s158 = sadd.s32 %s157, 1
      %s159 = scalar_select %p156, %s157, %s158
      %p162 = pneg %p156
      %p163 = scmp.eq.s32.totalorder %s14, 1
      %p164 = por %p162, %p163
      %p165 = scmp.ne.s32.totalorder %s157, %s160
      %p166 = scmp.eq.s32.totalorder %s14, 0
      %p167 = por %p165, %p166
      %p168 = scmp.ne.s32.totalorder %s157, %s160
      %p169 = scmp.eq.s32.totalorder %s19, 1
      %p170 = por %p168, %p169
      %p171 = scmp.ne.s32.totalorder %s160, %s161
      %p172 = scmp.eq.s32.totalorder %s19, 0
      %p173 = por %p171, %p172
      %p174 = scmp.ne.s32.totalorder %s160, %s161
      %p175 = scmp.eq.s32.totalorder %s20, 1
      %p176 = por %p174, %p175
      %p178 = scmp.ne.s32.totalorder %s161, %s177
      %p179 = scmp.eq.s32.totalorder %s20, 0
      %p180 = por %p178, %p179
      %p181 = scmp.le.s32.totalorder 1, %s14
      %p182 = scmp.lt.s32.totalorder %s14, 3
      %p183 = pnand %p181, %p182
      %p184 = pneg %p183
      // Predicated region
      $region9: #{downsample1d.1} parent=5 // pred_check
        _
      $region10: #{downsample1d.1} parent=5 // pred_check_branch
        %186 = sbr.rel (%p183) target = $region12
      $region11: #{downsample1d.1} parent=5 // pred_region
        %s187 = ssub.s32 %s14, 1
        // Predicated region
        $region13: #{downsample1d.1} parent=11 // pred_check
          %p188 = pneg %p75
        $region14: #{downsample1d.1} parent=11 // pred_check_branch
          %190 = sbr.rel (%p188) target = $region16
        $region15: #{downsample1d.1} parent=11 // pred_region
          _
        $region16: #{downsample1d.1} parent=11 // pred_fallthru
          _
        // Predicated region
        $region17: #{downsample1d.1} parent=11 // pred_check
          %p191 = pneg %p96
        $region18: #{downsample1d.1} parent=11 // pred_check_branch
          %193 = sbr.rel (%p191) target = $region20
        $region19: #{downsample1d.1} parent=11 // pred_region
          _
        $region20: #{downsample1d.1} parent=11 // pred_fallthru
          _
        // Predicated region
        $region21: #{downsample1d.1} parent=11 // pred_check
          %p194 = pneg %p117
        $region22: #{downsample1d.1} parent=11 // pred_check_branch
          %196 = sbr.rel (%p194) target = $region24
        $region23: #{downsample1d.1} parent=11 // pred_region
          _
        $region24: #{downsample1d.1} parent=11 // pred_fallthru
          _
      $region12: #{downsample1d.1} parent=5 // pred_fallthru
        _
      %p197 = scmp.lt.s32.totalorder %s14, 2
      // Predicated region
      $region25: #{downsample1d.1} parent=5 // pred_check
        %p198 = pneg %p197
      $region26: #{downsample1d.1} parent=5 // pred_check_branch
        %200 = sbr.rel (%p198) target = $region28
      $region27: #{downsample1d.1} parent=5 // pred_region
        // Predicated region
        $region29: #{downsample1d.1} parent=27 // pred_check
          %p201 = pneg %p48
        $region30: #{downsample1d.1} parent=27 // pred_check_branch
          %203 = sbr.rel (%p201) target = $region32
        $region31: #{downsample1d.1} parent=27 // pred_region
          %p204 = scmp.lt.s32.totalorder %s21, 1
          %s205 = scalar_select %p204, %s21, 1
          %p206 = scmp.lt.s32.totalorder %s22, 0
          %s207 = scalar_select %p206, %s22, 0
          %s208 = sadd.s32 %s207, %s205
          %s209 = smul.addr %s208, 8
          %s210 = scalar_lea.vmem %s0, %s209
        $region32: #{downsample1d.1} parent=27 // pred_fallthru
          _
        // Predicated region
        $region33: #{downsample1d.1} parent=27 // pred_check
          %p211 = pneg %p139
        $region34: #{downsample1d.1} parent=27 // pred_check_branch
          %213 = sbr.rel (%p211) target = $region36
        $region35: #{downsample1d.1} parent=27 // pred_region
          %p214 = scmp.lt.s32.totalorder %s21, 1
          %s215 = scalar_select %p214, %s21, 1
          %p216 = scmp.lt.s32.totalorder %s22, 0
          %s217 = scalar_select %p216, %s22, 0
          %s218 = sadd.s32 %s217, %s215
          %s219 = smul.addr %s218, 4
          %s220 = scalar_lea.vmem %s4, %s219
        $region36: #{downsample1d.1} parent=27 // pred_fallthru
          _
      $region28: #{downsample1d.1} parent=5 // pred_fallthru
        _
      %p221 = scmp.le.s32.totalorder 1, %s14
      %p222 = scmp.lt.s32.totalorder %s14, 3
      %p223 = pnand %p221, %p222
      %p224 = pneg %p223
      // Predicated region
      $region37: #{downsample1d.1} parent=5 // pred_check
        _
      $region38: #{downsample1d.1} parent=5 // pred_check_branch
        %226 = sbr.rel (%p223) target = $region40
      $region39: #{downsample1d.1} parent=5 // pred_region
        %s227 = ssub.s32 %s14, 1
        %p228 = scmp.lt.s32.totalorder %s23, 1
        %s229 = scalar_select %p228, %s23, 1
        %p230 = scmp.lt.s32.totalorder %s24, 0
        %s231 = scalar_select %p230, %s24, 0
        %s232 = sadd.s32 %s231, %s229
        %s233 = smul.addr %s232, 8
        %s234 = scalar_lea.vmem %s0, %s233
        %p235 = pneg %p54
        %p236 = pneg %p51
        %p237 = pneg %p75
        %p238 = pneg %p72
        %p239 = pneg %p96
        %p240 = pneg %p93
        %p241 = pneg %p117
        %p242 = pneg %p114
        %p243 = scmp.lt.s32.totalorder %s23, 1
        %s244 = scalar_select %p243, %s23, 1
        %p245 = scmp.lt.s32.totalorder %s24, 0
        %s246 = scalar_select %p245, %s24, 0
        %s247 = sadd.s32 %s246, %s244
        %s248 = smul.addr %s247, 4
        %s249 = scalar_lea.vmem %s4, %s248
        %p250 = pneg %p145
        %p251 = pneg %p142
        %p252 = pneg %p173
        %p253 = pneg %p170
        %s254 = sand.u32 %s160, 1
        %s255 = scalar_lea.sflag [#allocation3], %s254
        %s256 = sand.u32 %s160, 1
        %s257 = smul.addr %s256, 4
        %s258 = scalar_lea.vmem [#allocation2], %s257
        %p259 = scmp.lt.s32.totalorder %s23, 1
        %s260 = scalar_select %p259, %s23, 1
        %p261 = scmp.lt.s32.totalorder %s24, 0
        %s262 = scalar_select %p261, %s24, 0
        %s263 = sadd.s32 %s262, %s260
        %s264 = smul.addr %s263, 8
        %s265 = scalar_lea.vmem %s0, %s264
        %p266 = scmp.lt.s32.totalorder %s23, 1
        %s267 = scalar_select %p266, %s23, 1
        %p268 = scmp.lt.s32.totalorder %s24, 0
        %s269 = scalar_select %p268, %s24, 0
        %s270 = sadd.s32 %s269, %s267
        %s271 = smul.addr %s270, 4
        %s272 = scalar_lea.vmem %s4, %s271
        %v273 = vld [vmem:[%s265] sm:$0xff]
        %v274 = vld [vmem:[%s272] sm:$0xf]
        %v276 = vrot.slane %v273, 4
        %277 = vrot.lane.b32.xlu0 %v276, 1
        %v278 = vpop.permute.xlu0 %277
        %vm280 = vcmask 7168
        %v281 = vsel %vm280, %v274, %v278
        %v282 = vld [vmem:[%s1] sm:$0xf]
        %v283 = vld [vmem:[%s2] sm:$0xf]
        %vm284 = vcmask 31744
        %v286 = vsel %vm284, %v283, 0
        %vm288 = vcmask 1043456
        %v290 = vsel %vm288, %v281, 0
        %292 = vmatprep.subr.mxu0 0.0
        %293 = vmatpush1.msra.mxu0 %v290
        %294 = vmatprep.subr.mxu0 0.0
        %295 = vmatpush1.msra.mxu0 0.0
        %296 = vmatprep.subr.mxu0 0.0
        %297 = vmatpush1.msra.mxu0 0.0
        %298 = vmatprep.subr.mxu0 0.0
        %299 = vmatpush1.msra.mxu0 0.0
        %300 = vmatprep.subr.mxu0 0.0
        %301 = vmatpush1.msra.mxu0 0.0
        %302 = vmatprep.subr.mxu0 0.0
        %303 = vmatpush1.msra.mxu0 0.0
        %304 = vmatprep.subr.mxu0 0.0
        %305 = vmatpush1.msra.mxu0 0.0
        %306 = vmatprep.subr.mxu0 0.0
        %307 = vmatpush1.msra.mxu0 0.0
        %308 = vmatprep.subr.mxu0 0.0
        %309 = vmatpush1.msra.mxu0 0.0
        %310 = vmatprep.subr.mxu0 0.0
        %311 = vmatpush1.msra.mxu0 0.0
        %312 = vmatprep.subr.mxu0 0.0
        %313 = vmatpush1.msra.mxu0 0.0
        %314 = vmatprep.subr.mxu0 0.0
        %315 = vmatpush1.msra.mxu0 0.0
        %316 = vmatprep.subr.mxu0 0.0
        %317 = vmatpush1.msra.mxu0 0.0
        %318 = vmatprep.subr.mxu0 0.0
        %319 = vmatpush1.msra.mxu0 0.0
        %320 = vmatprep.subr.mxu0 0.0
        %321 = vmatpush1.msra.mxu0 0.0
        %322 = vmatprep.subr.mxu0 0.0
        %323 = vmatpush1.msra.mxu0 0.0
        %324 = vmatprep.subr.mxu0 0.0
        %325 = vmatpush1.msra.mxu0 0.0
        %326 = vmatprep.subr.mxu0 0.0
        %327 = vmatpush1.msra.mxu0 0.0
        %328 = vmatprep.subr.mxu0 0.0
        %329 = vmatpush1.msra.mxu0 0.0
        %330 = vmatprep.subr.mxu0 0.0
        %331 = vmatpush1.msra.mxu0 0.0
        %332 = vmatprep.subr.mxu0 0.0
        %333 = vmatpush1.msra.mxu0 0.0
        %334 = vmatprep.subr.mxu0 0.0
        %335 = vmatpush1.msra.mxu0 0.0
        %336 = vmatprep.subr.mxu0 0.0
        %337 = vmatpush1.msra.mxu0 0.0
        %338 = vmatprep.subr.mxu0 0.0
        %339 = vmatpush1.msra.mxu0 0.0
        %340 = vmatprep.subr.mxu0 0.0
        %341 = vmatpush1.msra.mxu0 0.0
        %342 = vmatprep.subr.mxu0 0.0
        %343 = vmatpush1.msra.mxu0 0.0
        %344 = vmatprep.subr.mxu0 0.0
        %345 = vmatpush1.msra.mxu0 0.0
        %346 = vmatprep.subr.mxu0 0.0
        %347 = vmatpush1.msra.mxu0 0.0
        %348 = vmatprep.subr.mxu0 0.0
        %349 = vmatpush1.msra.mxu0 0.0
        %350 = vmatprep.subr.mxu0 0.0
        %351 = vmatpush1.msra.mxu0 0.0
        %352 = vmatprep.subr.mxu0 0.0
        %353 = vmatpush1.msra.mxu0 0.0
        %354 = vmatprep.subr.mxu0 0.0
        %355 = vmatpush1.msra.mxu0 0.0
        %356 = vmatprep.mubr.f32.mxu0 0.0
        %357 = vmatmul.mubr.f32.gmra.mrb[0].mxu0 %v286
        %v358 = vpop.f32.mrb[0].mxu0
        %v359 = vadd.f32 0.0, %v358
        %v360 = vpop.f32.mrb[0].mxu0
        %361 = vdwg.mxu0
        %vm362 = vcmask 64512
        %v364 = vsel %vm362, %v282, 0
        %366 = vmatprep.subr.mxu0 0.0
        %367 = vmatpush1.msra.mxu0 %v273
        %368 = vmatprep.subr.mxu0 0.0
        %369 = vmatpush1.msra.mxu0 0.0
        %370 = vmatprep.subr.mxu0 0.0
        %371 = vmatpush1.msra.mxu0 0.0
        %372 = vmatprep.subr.mxu0 0.0
        %373 = vmatpush1.msra.mxu0 0.0
        %374 = vmatprep.subr.mxu0 0.0
        %375 = vmatpush1.msra.mxu0 0.0
        %376 = vmatprep.subr.mxu0 0.0
        %377 = vmatpush1.msra.mxu0 0.0
        %378 = vmatprep.subr.mxu0 0.0
        %379 = vmatpush1.msra.mxu0 0.0
        %380 = vmatprep.subr.mxu0 0.0
        %381 = vmatpush1.msra.mxu0 0.0
        %382 = vmatprep.subr.mxu0 0.0
        %383 = vmatpush1.msra.mxu0 0.0
        %384 = vmatprep.subr.mxu0 0.0
        %385 = vmatpush1.msra.mxu0 0.0
        %386 = vmatprep.subr.mxu0 0.0
        %387 = vmatpush1.msra.mxu0 0.0
        %388 = vmatprep.subr.mxu0 0.0
        %389 = vmatpush1.msra.mxu0 0.0
        %390 = vmatprep.subr.mxu0 0.0
        %391 = vmatpush1.msra.mxu0 0.0
        %392 = vmatprep.subr.mxu0 0.0
        %393 = vmatpush1.msra.mxu0 0.0
        %394 = vmatprep.subr.mxu0 0.0
        %395 = vmatpush1.msra.mxu0 0.0
        %396 = vmatprep.subr.mxu0 0.0
        %397 = vmatpush1.msra.mxu0 0.0
        %398 = vmatprep.subr.mxu0 0.0
        %399 = vmatpush1.msra.mxu0 0.0
        %400 = vmatprep.subr.mxu0 0.0
        %401 = vmatpush1.msra.mxu0 0.0
        %402 = vmatprep.subr.mxu0 0.0
        %403 = vmatpush1.msra.mxu0 0.0
        %404 = vmatprep.subr.mxu0 0.0
        %405 = vmatpush1.msra.mxu0 0.0
        %406 = vmatprep.subr.mxu0 0.0
        %407 = vmatpush1.msra.mxu0 0.0
        %408 = vmatprep.subr.mxu0 0.0
        %409 = vmatpush1.msra.mxu0 0.0
        %410 = vmatprep.subr.mxu0 0.0
        %411 = vmatpush1.msra.mxu0 0.0
        %412 = vmatprep.subr.mxu0 0.0
        %413 = vmatpush1.msra.mxu0 0.0
        %414 = vmatprep.subr.mxu0 0.0
        %415 = vmatpush1.msra.mxu0 0.0
        %416 = vmatprep.subr.mxu0 0.0
        %417 = vmatpush1.msra.mxu0 0.0
        %418 = vmatprep.subr.mxu0 0.0
        %419 = vmatpush1.msra.mxu0 0.0
        %420 = vmatprep.subr.mxu0 0.0
        %421 = vmatpush1.msra.mxu0 0.0
        %422 = vmatprep.subr.mxu0 0.0
        %423 = vmatpush1.msra.mxu0 0.0
        %424 = vmatprep.subr.mxu0 0.0
        %425 = vmatpush1.msra.mxu0 0.0
        %426 = vmatprep.subr.mxu0 0.0
        %427 = vmatpush1.msra.mxu0 0.0
        %428 = vmatprep.subr.mxu0 0.0
        %429 = vmatpush1.msra.mxu0 0.0
        %430 = vmatprep.mubr.f32.mxu0 0.0
        %431 = vmatmul.mubr.f32.gmra.mrb[0].mxu0 %v364
        %v432 = vpop.f32.mrb[0].mxu0
        %v433 = vadd.f32 %v359, %v432
        %v434 = vpop.f32.mrb[0].mxu0
        %435 = vdwg.mxu0
        %v436 = vld [vmem:[%s3] sm:$0xf]
        %438 = vset.pattern.permute.xlu0 0
        %439 = vperm.xlu0 %438, %v436
        %v440 = vpop.permute.xlu0 %439
        %v442 = vadd.f32 %v433, %v440
        %vm443 = vcmask 60416
        %444 = vst.msk [vmem:[%s258] sm:$0xf] %vm443, %v442
        %s445 = sand.u32 %s160, 1
        %s446 = scalar_lea.sflag [#allocation3], %s445
        %s447 = sand.u32 %s160, 1
        %s448 = smul.addr %s447, 4
        %s449 = scalar_lea.vmem [#allocation2], %s448
        // Predicated region
        $region41: #{downsample1d.1} parent=39 // pred_check
          %p450 = pneg %p170
        $region42: #{downsample1d.1} parent=39 // pred_check_branch
          %452 = sbr.rel (%p450) target = $region44
        $region43: #{downsample1d.1} parent=39 // pred_region
          %s454 = ssub.s32 64, 64
          %455 = vsyncadd %s446, %s454
          %s456 = sadd.s32 %s24, %s23
          %s457 = smul.addr %s456, 64
          %s458 = scalar_lea.hbm %s5, %s457
          %s460 = sshll.u32 %s449, 4
          %s461 = int_to_ptr.vmem [resolvable:$true] %s460
          %463 = dma.vmem_to_hbm [thread:$0]  %s461, 64, %s458, %s446
        $region44: #{downsample1d.1} parent=39 // pred_fallthru
          _
      $region40: #{downsample1d.1} parent=5 // pred_fallthru
        _
      %p464 = scmp.le.s32.totalorder 2, %s14
      // Predicated region
      $region45: #{downsample1d.1} parent=5 // pred_check
        %p465 = pneg %p464
      $region46: #{downsample1d.1} parent=5 // pred_check_branch
        %467 = sbr.rel (%p465) target = $region48
      $region47: #{downsample1d.1} parent=5 // pred_region
        %s468 = ssub.s32 %s14, 2
        // Predicated region
        $region49: #{downsample1d.1} parent=47 // pred_check
          %p469 = pneg %p176
        $region50: #{downsample1d.1} parent=47 // pred_check_branch
          %471 = sbr.rel (%p469) target = $region52
        $region51: #{downsample1d.1} parent=47 // pred_region
          %s472 = sand.u32 %s161, 1
          %s473 = scalar_lea.sflag [#allocation3], %s472
          %s474 = sand.u32 %s161, 1
          %s475 = smul.addr %s474, 4
          %s476 = scalar_lea.vmem [#allocation2], %s475
          %477 = dma.done %s473, 64
        $region52: #{downsample1d.1} parent=47 // pred_fallthru
          _
      $region48: #{downsample1d.1} parent=5 // pred_fallthru
        _
    $region6: #{downsample1d.1} parent=1 // loop_footer
      %s18 = sadd.s32 1, %s14
    $region7: #{downsample1d.1} parent=1 // loop_footer_branch
      %13 = sbr.rel target = $region3
    $region8: #{downsample1d.1} parent=1 // loop_exit
      _
    %478 = vsyncpa [#allocation3], 1
    %s479 = scalar_lea.sflag [#allocation3], 1
    %480 = vsyncpa %s479, 1

</llo_original>
